<compile_context>
chip_gen: v5e
topology: v5e:2x2
jax: 0.10.0
libtpu: 0.0.40
codegen_flags: <defaults>
</compile_context>

<pallas_src>
import functools

import jax
import jax.numpy as jnp
from jax import lax
from jax.experimental import pallas as pl
from jax.experimental.pallas import tpu as pltpu


def _round_up(v, m):
    return ((v + m - 1) // m) * m


def _vmem_budget_bytes():
    """Generation-aware working-set budget for the double-buffered output block."""
    try:
        cap = pltpu.get_tpu_info().vmem_capacity_bytes
    except Exception:
        cap = 64 * 1024 * 1024  # conservative fallback (v7x per-TC physical VMEM)
    # Use at most a quarter of physical VMEM, capped at 24 MiB, so the working set sits
    # comfortably under v5e's 16 MiB default scoped limit (raised via vmem_limit_bytes),
    # v6e's 32 MiB scoped, and v7x's 32 MiB scoped / 64 MiB physical.
    return min(cap // 4, 24 * 1024 * 1024)


def _choose_k_tiling(num_keep, d, itemsize, batch):
    """Pick (k_tile, k_padded, num_k_tiles) for the gathered-row axis.

    Only the double-buffered (1, KT, D) output block lives in VMEM, so the budget
    check is exact.  When a single k-tile suffices we use a full-extent block
    (KT == num_keep), which is a legal BlockSpec for any num_keep and requires no
    padding and no wrapper slice.
    """
    budget = _vmem_budget_bytes()
    row_bytes = max(1, d * itemsize)
    max_kt = max(8, ((budget // (2 * row_bytes)) // 8) * 8)

    # v7x has 2 TensorCores per chip: guarantee >= 2 "parallel" grid steps even when
    # batch == 1 by splitting the kept rows (independent output tiles, no reduction).
    min_tiles = 2 if (batch < 2 and num_keep >= 16) else 1

    if num_keep <= max_kt and min_tiles == 1:
        return num_keep, num_keep, 1  # single full-extent tile: no padding, no slice

    n_k = max(min_tiles, pl.cdiv(num_keep, max_kt))
    kt = _round_up(pl.cdiv(num_keep, n_k), 8)
    return kt, kt * n_k, n_k


def _dma_gather_kernel(idx_ref, x_hbm, o_ref, sem, *, kt):
    """Gather KT kept patch rows with per-row async DMAs, HBM -> output VMEM block.

    idx_ref : SMEM (B, K_pad) int32   -- scalar-prefetched kept-patch indices
    x_hbm   : ANY  (B, N, D)          -- full input, stays in HBM (never read densely)
    o_ref   : VMEM (1, KT, D)         -- output block for this (batch, k-tile)
    sem     : scalar DMA semaphore    -- all row copies signal it; drained KT times
    """
    bi = pl.program_id(0)
    base = pl.program_id(1) * kt

    # Issue every row copy of this tile before waiting on any of them, keeping the DMA
    # queue deep so row transfers overlap each other (and the output write-back of the
    # previous grid step).
    @pl.loop(0, kt)
    def _issue(j):
        row = idx_ref[bi, base + j]
        pltpu.make_async_copy(x_hbm.at[bi, row], o_ref.at[0, j], sem).start()

    # All copies signalled the same semaphore and have identical size, so waiting KT
    # times with a fixed, shape-matching descriptor drains exactly the total.
    @pl.loop(0, kt)
    def _wait(j):
        pltpu.make_async_copy(x_hbm.at[0, 0], o_ref.at[0, 0], sem).wait()


def patch_dropout(x, prob, key, *, training=True, force_keep_all=False):
    """JAX/Pallas equivalent of PatchDropout.forward."""
    assert 0 <= prob < 1.0
    if (not training) or prob == 0.0 or force_keep_all:
        return x

    b, n, d = x.shape
    num_keep = max(1, int(n * (1 - prob)))

    # torch.randn(b, n).topk(num_keep, dim=-1).indices  (top-k value order preserved).
    noise = jax.random.normal(key, (b, n), dtype=jnp.float32)
    _, keep_idx = lax.top_k(noise, num_keep)
    keep_idx = keep_idx.astype(jnp.int32)

    itemsize = jnp.dtype(x.dtype).itemsize
    kt, k_pad, n_k = _choose_k_tiling(num_keep, d, itemsize, b)

    if k_pad != num_keep:
        # Pad indices with 0 (a harmless duplicate of row 0, sliced off below).
        keep_idx = jnp.pad(keep_idx, ((0, 0), (0, k_pad - num_keep)))

    # The only VMEM consumer is the double-buffered output block; give it headroom and
    # raise v5e's 16 MiB default scoped limit explicitly when needed.
    vmem_limit = int(max(2 * kt * d * itemsize + (4 << 20), 16 << 20))

    cost = pl.CostEstimate(
        flops=0,
        transcendentals=0,
        bytes_accessed=int(2 * b * k_pad * d * itemsize   # read kept rows + write them
                           + b * k_pad * 4),              # index reads
    )

    out = pl.pallas_call(
        functools.partial(_dma_gather_kernel, kt=kt),
        out_shape=jax.ShapeDtypeStruct((b, k_pad, d), x.dtype),
        grid_spec=pltpu.PrefetchScalarGridSpec(
            num_scalar_prefetch=1,
            grid=(b, n_k),
            in_specs=[pl.BlockSpec(memory_space=pl.ANY)],   # x stays in HBM
            out_specs=pl.BlockSpec((1, kt, d), lambda bi, ki, idx: (bi, ki, 0)),
            scratch_shapes=[pltpu.SemaphoreType.DMA(())],
        ),
        compiler_params=pltpu.CompilerParams(
            dimension_semantics=("parallel", "parallel"),
            vmem_limit_bytes=vmem_limit,
        ),
        cost_estimate=cost,
    )(keep_idx, x)

    if k_pad != num_keep:
        # TODO(synk): consumers that can carry (padded_out, num_keep) avoid this XLA
        # slice copy entirely; it only triggers when num_keep % k_tile != 0.
        out = out[:, :num_keep]
    return out


if __name__ == "__main__":
    root = jax.random.PRNGKey(0)
    k_x, k_drop, k_x2, k_x3 = jax.random.split(root, 4)

    def reference(x, prob, key):
        bb, nn, _ = x.shape
        nk = max(1, int(nn * (1 - prob)))
        noise = jax.random.normal(key, (bb, nn), dtype=jnp.float32)
        _, idx = lax.top_k(noise, nk)
        return jnp.take_along_axis(x, idx[..., None], axis=1)

    # 1) Main path: batch >= 2, single k-tile, no padding.
    B, N, D = 2, 16, 256
    prob = 0.5
    x = jax.random.normal(k_x, (B, N, D), dtype=jnp.float32)
    out = jax.block_until_ready(patch_dropout(x, prob, k_drop, training=True))
    ref = reference(x, prob, k_drop)
    assert out.shape == ref.shape and out.dtype == x.dtype, (out.shape, out.dtype)
    assert jnp.array_equal(out, ref), "DMA gather mismatch vs reference (case 1)"

    # 2) batch == 1 -> kept rows split into >= 2 parallel k-tiles (v7x megacore path).
    x2 = jax.random.normal(k_x2, (1, 32, 256), dtype=jnp.float32)
    out2 = jax.block_until_ready(patch_dropout(x2, 0.5, k_drop, training=True))
    assert jnp.array_equal(out2, reference(x2, 0.5, k_drop)), "mismatch (case 2)"

    # 3) num_keep not divisible by the k-tile -> padded tiles + wrapper slice.
    x3 = jax.random.normal(k_x3, (1, 44, 256), dtype=jnp.float32)
    out3 = jax.block_until_ready(patch_dropout(x3, 0.5, k_drop, training=True))
    assert jnp.array_equal(out3, reference(x3, 0.5, k_drop)), "mismatch (case 3)"

    # Eval / force_keep_all paths are identity.
    assert jnp.array_equal(patch_dropout(x, prob, k_drop, training=False), x)
    assert jnp.array_equal(
        patch_dropout(x, prob, k_drop, training=True, force_keep_all=True), x)

    print("KERNEL_OK")
</pallas_src>

<mosaic_0001>
module attributes {stable_mosaic.version = 11 : i64} {
  func.func @_dma_gather_kernel(%arg0: i32, %arg1: i32, %arg2: memref<2x8xi32, #tpu.memory_space<smem>>, %arg3: memref<2x16x256xf32, #tpu.memory_space<any>>, %arg4: memref<1x8x256xf32, #tpu.memory_space<vmem>>, %arg5: memref<!tpu.dma_semaphore, #tpu.memory_space<semaphore_mem>>) attributes {dimension_semantics = [#tpu.dimension_semantics<parallel>, #tpu.dimension_semantics<parallel>], iteration_bounds = array<i64: 2, 1>, scalar_prefetch = 1 : i64, scratch_operands = 1 : i64, tpu.core_type = #tpu.core_type<tc>, window_params = [{}, {transform_indices = @transform_1, window_bounds = array<i64: 1, 8, 256>}]} {
    %c8_i32 = arith.constant 8 : i32
    %0 = arith.muli %arg1, %c8_i32 : i32
    %c0_i32 = arith.constant 0 : i32
    %c8_i32_0 = arith.constant 8 : i32
    %1 = arith.addi %c0_i32, %c8_i32_0 : i32
    %c1_i32 = arith.constant 1 : i32
    scf.for %arg6 = %c0_i32 to %1 step %c1_i32  : i32 {
      %c1_i32_5 = arith.constant 1 : i32
      %3 = arith.muli %arg6, %c1_i32_5 : i32
      %c0_i32_6 = arith.constant 0 : i32
      %4 = arith.addi %c0_i32_6, %3 : i32
      %5 = arith.addi %0, %4 : i32
      %6 = arith.index_cast %arg0 : i32 to index
      %7 = arith.index_cast %5 : i32 to index
      %8 = memref.load %arg2[%6, %7] : memref<2x8xi32, #tpu.memory_space<smem>>
      %c0_i32_7 = arith.constant 0 : i32
      %c0_i32_8 = arith.constant 0 : i32
      %9 = tpu.memref_slice %arg3[%arg0, %8, %c0_i32_8] : memref<2x16x256xf32, #tpu.memory_space<any>> -> memref<1x1x256xf32, #tpu.memory_space<any>>
      %10 = tpu.memref_squeeze %9 : memref<1x1x256xf32, #tpu.memory_space<any>> -> memref<256xf32, #tpu.memory_space<any>>
      %c0_i32_9 = arith.constant 0 : i32
      %11 = tpu.memref_slice %arg4[%c0_i32_7, %4, %c0_i32_9] : memref<1x8x256xf32, #tpu.memory_space<vmem>> -> memref<1x1x256xf32, #tpu.memory_space<vmem>>
      %12 = tpu.memref_squeeze %11 : memref<1x1x256xf32, #tpu.memory_space<vmem>> -> memref<256xf32, #tpu.memory_space<vmem>>
      tpu.enqueue_dma source(%10 : memref<256xf32, #tpu.memory_space<any>>) target(%12 : memref<256xf32, #tpu.memory_space<vmem>>) target_semaphore(%arg5 : memref<!tpu.dma_semaphore, #tpu.memory_space<semaphore_mem>>)
    }
    %c8_i32_1 = arith.constant 8 : i32
    %c0_i32_2 = arith.constant 0 : i32
    %c8_i32_3 = arith.constant 8 : i32
    %2 = arith.addi %c0_i32_2, %c8_i32_3 : i32
    %c1_i32_4 = arith.constant 1 : i32
    scf.for %arg6 = %c0_i32_2 to %2 step %c1_i32_4  : i32 {
      %c0_i32_5 = arith.constant 0 : i32
      %c0_i32_6 = arith.constant 0 : i32
      %c0_i32_7 = arith.constant 0 : i32
      %c0_i32_8 = arith.constant 0 : i32
      %c0_i32_9 = arith.constant 0 : i32
      %3 = tpu.memref_slice %arg3[%c0_i32_5, %c0_i32_6, %c0_i32_9] : memref<2x16x256xf32, #tpu.memory_space<any>> -> memref<1x1x256xf32, #tpu.memory_space<any>>
      %4 = tpu.memref_squeeze %3 : memref<1x1x256xf32, #tpu.memory_space<any>> -> memref<256xf32, #tpu.memory_space<any>>
      %c0_i32_10 = arith.constant 0 : i32
      %5 = tpu.memref_slice %arg4[%c0_i32_7, %c0_i32_8, %c0_i32_10] : memref<1x8x256xf32, #tpu.memory_space<vmem>> -> memref<1x1x256xf32, #tpu.memory_space<vmem>>
      %6 = tpu.memref_squeeze %5 : memref<1x1x256xf32, #tpu.memory_space<vmem>> -> memref<256xf32, #tpu.memory_space<vmem>>
      tpu.wait_dma2 semaphore(%arg5 : memref<!tpu.dma_semaphore, #tpu.memory_space<semaphore_mem>>) src(%4 : memref<256xf32, #tpu.memory_space<any>>) dst(%6 : memref<256xf32, #tpu.memory_space<vmem>>)
    }
    return
  }
  func.func @transform_1(%arg0: i32, %arg1: i32, %arg2: memref<2x8xi32, #tpu.memory_space<smem>>) -> (i32, i32, i32) {
    %c0_i32 = arith.constant 0 : i32
    %c0_i32_0 = arith.constant 0 : i32
    return %arg0, %arg1, %c0_i32 : i32, i32, i32
  }
}

</mosaic_0001>

<llo_original>
// kernel: tpu_custom_call.1
$region0: #{tpu_custom_call.1}
  #allocation0 [shape = 'u32[]', space=smem, size = 0x4, offset = 0x4, fixed_abs, tag = 'smem constant byte address 0x4 - core index']
  #allocation1 [shape = 'u32[72,128]{1,0:T(1,128)}', space=vmem, size = 0x9000, scoped, tag = 'internal scratch']
  #allocation2 [shape = 's32[1]{0}', space=sflag, size = 0x4, scoped, tag = 'scratch operand']
  #allocation3 [shape = 's32[1]{0}', space=sflag, size = 0x4, scoped, tag = 'scoped memory for tpu_custom_call.1']
  #allocation4 [shape = 'u8[1024]{0}', space=smem, size = 0x400, scoped, tag = 'prefetched SMEM operand 0']
  #allocation7 [shape = 's32[]', space=sflag, size = 0x4, offset = 0, fixed_abs, tag = 'sflag constant byte address 0x0 - dummy sync flag']
  %s0 = inlined_call_operand.hbm [shape: s32[2,8], index: 0, kind: input, shape index: {}]
  %s1 = inlined_call_operand.hbm [shape: f32[2,16,256], index: 1, kind: input, shape index: {}]
  %s2 = inlined_call_operand.hbm [shape: f32[2,8,256], index: 2, kind: output, shape index: {}]
  %s3 = sld [smem:[#allocation0]]
  $region39: #{tpu_custom_call.1} parent=0
    _
  %s5 = ssub.s32 1, %s3
  %s6 = scalar_select 0, %s5, %s3
  %s8 = sshll.u32 %s0, 4
  %s9 = int_to_ptr.hbm [resolvable:$true] %s8
  %11 = dma.hbm_to_smem %s9, 32, [#allocation4], [#allocation3]
  %13 = dma.done [#allocation3], 32
  %14 = sfence
  $region1: #{tpu_custom_call.1} parent=0
    #allocation5 [shape = 'u8[16384]{0}', space=vmem, size = 0x4000, scoped, tag = 'output window, operand 0']
    #allocation6 [shape = 's32[2]{0}', space=sflag, size = 0x8, scoped, tag = 'scoped memory for tpu_custom_call.1']
    %15 = vsyncpa [#allocation6], 0
    %s16 = scalar_lea.sflag [#allocation6], 1
    %17 = vsyncpa %s16, 0
    loop: start=0, step=1, limit=3
    $region2: #{tpu_custom_call.1} parent=1 // loop_pre_header
      _
    $region3: #{tpu_custom_call.1} parent=1 // loop_header
      %s19 = sphi 0, %s23
      %p20 = scmp.ge.s32.totalorder %s19, 3
      %s25 = sphi 0, %s35
      %s26 = sphi 0, %s31
      %s27 = sphi 0, %s25
      %s28 = sphi 0, %s26
      %s40 = sphi 0, %s42
      %s43 = sphi 0, %s40
      %s53 = sphi 0, %s43
    $region4: #{tpu_custom_call.1} parent=1 // loop_header_branch
      %22 = sbr.rel (%p20) target = $region8
    $region5: #{tpu_custom_call.1} parent=1 // loop_body
      %s24 = ssub.s32 %s19, 1
      %s29 = sadd.s32 1, %s26
      %p30 = scmp.ge.s32.totalorder %s29, 1
      %s31 = scalar_select %p30, 0, %s29
      %s32 = sadd.s32 1, %s25
      %s33 = scalar_select %p30, %s32, %s25
      %p34 = scmp.ge.s32.totalorder %s33, 2
      %s35 = scalar_select %p34, 0, %s33
      %s36 = ssub.s32 %s25, %s35
      %s37 = ssub.s32 %s26, %s31
      %s38 = sor.u32 %s36, %s37
      %p39 = scmp.eq.s32.totalorder %s38, 0
      %s41 = sadd.s32 %s40, 1
      %s42 = scalar_select %p39, %s40, %s41
      %p44 = pneg %p39
      %p45 = scmp.eq.s32.totalorder %s19, 1
      %p46 = por %p44, %p45
      %p47 = scmp.ne.s32.totalorder %s40, %s43
      %p48 = scmp.eq.s32.totalorder %s19, 0
      %p49 = por %p47, %p48
      %p50 = scmp.ne.s32.totalorder %s40, %s43
      %p51 = scmp.eq.s32.totalorder %s24, 1
      %p52 = por %p50, %p51
      %p54 = scmp.ne.s32.totalorder %s43, %s53
      %p55 = scmp.eq.s32.totalorder %s24, 0
      %p56 = por %p54, %p55
      %p57 = scmp.lt.s32.totalorder %s19, 2
      // Predicated region
      $region9: #{tpu_custom_call.1} parent=5 // pred_check
        %p58 = pneg %p57
      $region10: #{tpu_custom_call.1} parent=5 // pred_check_branch
        %60 = sbr.rel (%p58) target = $region12
      $region11: #{tpu_custom_call.1} parent=5 // pred_region
        %p61 = pneg %p49
        %p62 = pneg %p46
        %s63 = sand.u32 %s40, 1
        %s64 = scalar_lea.sflag [#allocation6], %s63
        %s65 = sand.u32 %s40, 1
        %s66 = smul.addr %s65, 16
        %s67 = scalar_lea.vmem [#allocation5], %s66
        %s68 = smul.u32 %s26, 8
        loop: start=0, step=1, limit=8
        $region13: #{tpu_custom_call.1} parent=11 // loop_pre_header
          _
        $region14: #{tpu_custom_call.1} parent=11 // loop_header
          %s70 = sphi 0, %s74
          %p71 = scmp.ge.s32.totalorder %s70, 8
        $region15: #{tpu_custom_call.1} parent=11 // loop_header_branch
          %73 = sbr.rel (%p71) target = $region19
        $region16: #{tpu_custom_call.1} parent=11 // loop_body
          %s75 = sadd.s32 %s68, %s70
          %s76 = sshra.s32 %s75, 7
          %s77 = sand.u32 %s75, 127
          %s78 = sadd.s32 %s76, %s25
          %s79 = smul.u32 %s78, 128
          %s80 = sshra.s32 %s75, 7
          %s81 = sand.u32 %s75, 127
          %s82 = sadd.s32 %s79, %s81
          %s83 = sld [smem:[#allocation4 + %s82]]
          %s84 = sshrl.u32 %s83, 3
          %s85 = sand.u32 %s83, 7
          %s86 = smul.u32 %s84, 16
          %s87 = sadd.s32 %s85, %s86
          %s88 = smul.u32 %s25, 32
          %s89 = sadd.s32 %s87, %s88
          %s90 = scalar_lea.hbm %s1, %s89
          %s91 = sshrl.u32 %s70, 3
          %s92 = sand.u32 %s70, 7
          %s93 = smul.u32 %s91, 16
          %s94 = sadd.s32 %s92, %s93
          %s95 = scalar_lea.vmem %s67, %s94 [#allocation5]
          %s96 = sshll.u32 %s90, 4
          %s97 = int_to_ptr.hbm [resolvable:$true] %s96
          %s98 = sshll.u32 %s95, 4
          %s99 = int_to_ptr.vmem [resolvable:$true] %s98
          %103 = dma.hbm_to_vmem [thread:$0]  %s97, 32, %s99, [#allocation2], 128, 128, 1
        $region17: #{tpu_custom_call.1} parent=11 // loop_footer
          %s74 = sadd.s32 1, %s70
        $region18: #{tpu_custom_call.1} parent=11 // loop_footer_branch
          %69 = sbr.rel target = $region14
        $region19: #{tpu_custom_call.1} parent=11 // loop_exit
          _
        loop: start=0, step=1, limit=8
        $region20: #{tpu_custom_call.1} parent=11 // loop_pre_header
          _
        $region21: #{tpu_custom_call.1} parent=11 // loop_header
          %s105 = sphi 0, %s109
          %p106 = scmp.ge.s32.totalorder %s105, 8
        $region22: #{tpu_custom_call.1} parent=11 // loop_header_branch
          %108 = sbr.rel (%p106) target = $region26
        $region23: #{tpu_custom_call.1} parent=11 // loop_body
          %111 = dma.done [#allocation2], 32
        $region24: #{tpu_custom_call.1} parent=11 // loop_footer
          %s109 = sadd.s32 1, %s105
        $region25: #{tpu_custom_call.1} parent=11 // loop_footer_branch
          %104 = sbr.rel target = $region21
        $region26: #{tpu_custom_call.1} parent=11 // loop_exit
          _
        %s112 = sand.u32 %s40, 1
        %s113 = scalar_lea.sflag [#allocation6], %s112
        %s114 = sand.u32 %s40, 1
        %s115 = smul.addr %s114, 16
        %s116 = scalar_lea.vmem [#allocation5], %s115
        // Predicated region
        $region27: #{tpu_custom_call.1} parent=11 // pred_check
          %p117 = pneg %p46
        $region28: #{tpu_custom_call.1} parent=11 // pred_check_branch
          %119 = sbr.rel (%p117) target = $region30
        $region29: #{tpu_custom_call.1} parent=11 // pred_region
          %121 = vsyncadd %s113, 0
          %s122 = smul.addr %s26, 2
          %s123 = smul.addr %s25, 2
          %s124 = sadd.s32 %s122, %s123
          %s125 = smul.addr %s124, 8
          %s126 = scalar_lea.hbm %s2, %s125
          %s128 = sshll.u32 %s116, 4
          %s129 = int_to_ptr.vmem [resolvable:$true] %s128
          %s130 = sshll.u32 %s126, 4
          %s131 = int_to_ptr.hbm [resolvable:$true] %s130
          %133 = dma.vmem_to_hbm [thread:$0]  %s129, 256, %s131, %s113
        $region30: #{tpu_custom_call.1} parent=11 // pred_fallthru
          _
      $region12: #{tpu_custom_call.1} parent=5 // pred_fallthru
        _
      %p134 = scmp.le.s32.totalorder 1, %s19
      // Predicated region
      $region31: #{tpu_custom_call.1} parent=5 // pred_check
        %p135 = pneg %p134
      $region32: #{tpu_custom_call.1} parent=5 // pred_check_branch
        %137 = sbr.rel (%p135) target = $region34
      $region33: #{tpu_custom_call.1} parent=5 // pred_region
        %s138 = ssub.s32 %s19, 1
        // Predicated region
        $region35: #{tpu_custom_call.1} parent=33 // pred_check
          %p139 = pneg %p52
        $region36: #{tpu_custom_call.1} parent=33 // pred_check_branch
          %141 = sbr.rel (%p139) target = $region38
        $region37: #{tpu_custom_call.1} parent=33 // pred_region
          %s142 = sand.u32 %s43, 1
          %s143 = scalar_lea.sflag [#allocation6], %s142
          %s144 = sand.u32 %s43, 1
          %s145 = smul.addr %s144, 16
          %s146 = scalar_lea.vmem [#allocation5], %s145
          %148 = dma.done %s143, 256
        $region38: #{tpu_custom_call.1} parent=33 // pred_fallthru
          _
      $region34: #{tpu_custom_call.1} parent=5 // pred_fallthru
        _
    $region6: #{tpu_custom_call.1} parent=1 // loop_footer
      %s23 = sadd.s32 1, %s19
    $region7: #{tpu_custom_call.1} parent=1 // loop_footer_branch
      %18 = sbr.rel target = $region3
    $region8: #{tpu_custom_call.1} parent=1 // loop_exit
      _
    %149 = vsyncpa [#allocation6], 1
    %s150 = scalar_lea.sflag [#allocation6], 1
    %151 = vsyncpa %s150, 1
  %152 = vsyncmov [#allocation2]
  %s153 = vpop.sfrf %152
  %p154 = scmp.eq.s32.totalorder %s153, 0
  %p155 = pneg %p154
  %157 = shalt.err (%p155)

</llo_original>
